<compile_context>
chip_gen: v7x
topology: tpu7x:2x2x1
jax: 0.10.0
libtpu: 0.0.40
codegen_flags: <defaults>
</compile_context>

<pallas_src>
import jax
import jax.numpy as jnp
from jax.experimental import pallas as pl
from jax.experimental.pallas import tpu as pltpu

B = 2         # batch
S = 8         # sequence length
D_MODEL = 32  # model width
D_FF = 64     # hidden width
ROWS = B * S  # 16 flattened positions


def ffn_kernel(x_ref, w1_ref, w2_ref, b1_ref, b2_ref, out_ref):
    # x_ref:  (ROWS, D_MODEL) f32
    # w1_ref: (D_MODEL, D_FF) bf16, [in, out] layout (== nn.Linear weight.T)
    # w2_ref: (D_FF, D_MODEL) bf16, [in, out] layout
    # b1_ref: (1, D_FF) f32, b2_ref: (1, D_MODEL) f32
    x = x_ref[...]

    # MXU-native bf16 operands, f32 accumulation.
    h = jnp.dot(x.astype(jnp.bfloat16), w1_ref[...],
                preferred_element_type=jnp.float32)
    # Bias + ReLU stay f32 on the VPU (no bf16 pack/unpack on v5e).
    h = jnp.maximum(h + b1_ref[...], 0.0)

    # Dropout is identity in eval mode / p == 0.
    # TODO(synk): training-mode dropout (p>0) needs pltpu.prng_seed /
    # prng_random_bits and a 1/(1-p) rescale.

    y = jnp.dot(h.astype(jnp.bfloat16), w2_ref[...],
                preferred_element_type=jnp.float32)
    out_ref[...] = y + b2_ref[...]


def feed_forward_block(x, w1, b1, w2, b2):
    """x: (B, S, D_MODEL); w1: (D_MODEL, D_FF); b1: (D_FF,);
       w2: (D_FF, D_MODEL); b2: (D_MODEL,)."""
    bb, s, d = x.shape
    rows = bb * s
    x2 = x.reshape(rows, d)            # flatten batch*seq into rows (metadata only)

    vmem_spec = pl.BlockSpec(memory_space=pltpu.MemorySpace.VMEM)

    flops = 2 * rows * D_MODEL * D_FF + 2 * rows * D_FF * D_MODEL
    bytes_accessed = (x2.size * 4            # x  (f32 in)
                      + w1.size * 2          # W1 (bf16 in)
                      + w2.size * 2          # W2 (bf16 in)
                      + b1.size * 4 + b2.size * 4
                      + rows * d * 4)        # out (f32)

    out = pl.pallas_call(
        ffn_kernel,
        out_shape=jax.ShapeDtypeStruct((rows, d), jnp.float32),
        in_specs=[vmem_spec] * 5,
        out_specs=vmem_spec,
        cost_estimate=pl.CostEstimate(flops=flops, transcendentals=0,
                                      bytes_accessed=bytes_accessed),
    )(
        x2,
        w1.astype(jnp.bfloat16),       # in real usage: stored bf16 at init time
        w2.astype(jnp.bfloat16),
        b1.reshape(1, D_FF),           # metadata-only reshape, no packing ops
        b2.reshape(1, D_MODEL),
    )
    return out.reshape(bb, s, d)


# ------------------------- pure-JAX reference -------------------------
def feed_forward_ref(x, w1, b1, w2, b2):
    h = jnp.maximum(jnp.dot(x, w1) + b1, 0.0)
    return jnp.dot(h, w2) + b2


if __name__ == "__main__":
    key = jax.random.PRNGKey(0)
    k0, k1, k2, k3, k4 = jax.random.split(key, 5)

    x = jax.random.normal(k0, (B, S, D_MODEL), jnp.float32)
    # [in, out] layout == transpose of nn.Linear's (out, in) weight matrix.
    w1 = (0.1 * jax.random.normal(k1, (D_MODEL, D_FF))).astype(jnp.float32)
    b1 = (0.05 * jax.random.normal(k2, (D_FF,))).astype(jnp.float32)
    w2 = (0.1 * jax.random.normal(k3, (D_FF, D_MODEL))).astype(jnp.float32)
    b2 = (0.05 * jax.random.normal(k4, (D_MODEL,))).astype(jnp.float32)

    out = feed_forward_block(x, w1, b1, w2, b2)
    out = jax.block_until_ready(out)

    ref = feed_forward_ref(x, w1, b1, w2, b2)
    # bf16 MXU operands (f32 accumulation) -> ~0.5-1% relative error budget.
    if not jnp.allclose(out, ref, atol=2e-2, rtol=2e-2):
        raise AssertionError("Pallas kernel output mismatch vs JAX reference")

    print("KERNEL_OK")
</pallas_src>

<mosaic_0001>
module attributes {stable_mosaic.version = 11 : i64} {
  func.func @ffn_kernel(%arg0: memref<16x32xf32, #tpu.memory_space<vmem>>, %arg1: memref<32x64xbf16, #tpu.memory_space<vmem>>, %arg2: memref<64x32xbf16, #tpu.memory_space<vmem>>, %arg3: memref<1x64xf32, #tpu.memory_space<vmem>>, %arg4: memref<1x32xf32, #tpu.memory_space<vmem>>, %arg5: memref<16x32xf32, #tpu.memory_space<vmem>>) attributes {dimension_semantics = [], scalar_prefetch = 0 : i64, scratch_operands = 0 : i64, tpu.core_type = #tpu.core_type<tc>} {
    %c0 = arith.constant 0 : index
    %c0_0 = arith.constant 0 : index
    %0 = vector.load %arg0[%c0, %c0_0] : memref<16x32xf32, #tpu.memory_space<vmem>>, vector<16x32xf32>
    %1 = arith.truncf %0 : vector<16x32xf32> to vector<16x32xbf16>
    %c0_1 = arith.constant 0 : index
    %c0_2 = arith.constant 0 : index
    %2 = vector.load %arg1[%c0_1, %c0_2] : memref<32x64xbf16, #tpu.memory_space<vmem>>, vector<32x64xbf16>
    %cst = arith.constant dense<0.000000e+00> : vector<16x64xf32>
    %3 = tpu.matmul %1, %2, %cst {dimension_numbers = #tpu.dot_dimension_numbers<[1], [0], [0], [1], [0, 0, 1, 1], [], []>} : vector<16x32xbf16>, vector<32x64xbf16>, vector<16x64xf32> -> vector<16x64xf32>
    %c0_3 = arith.constant 0 : index
    %c0_4 = arith.constant 0 : index
    %4 = vector.load %arg3[%c0_3, %c0_4] : memref<1x64xf32, #tpu.memory_space<vmem>>, vector<1x64xf32>
    %5 = vector.broadcast %4 : vector<1x64xf32> to vector<16x64xf32>
    %6 = arith.addf %3, %5 : vector<16x64xf32>
    %cst_5 = arith.constant 0.000000e+00 : f32
    %7 = vector.broadcast %cst_5 : f32 to vector<16x64xf32>
    %8 = arith.maximumf %6, %7 : vector<16x64xf32>
    %9 = arith.truncf %8 : vector<16x64xf32> to vector<16x64xbf16>
    %c0_6 = arith.constant 0 : index
    %c0_7 = arith.constant 0 : index
    %10 = vector.load %arg2[%c0_6, %c0_7] : memref<64x32xbf16, #tpu.memory_space<vmem>>, vector<64x32xbf16>
    %cst_8 = arith.constant dense<0.000000e+00> : vector<16x32xf32>
    %11 = tpu.matmul %9, %10, %cst_8 {dimension_numbers = #tpu.dot_dimension_numbers<[1], [0], [0], [1], [0, 0, 1, 1], [], []>} : vector<16x64xbf16>, vector<64x32xbf16>, vector<16x32xf32> -> vector<16x32xf32>
    %c0_9 = arith.constant 0 : index
    %c0_10 = arith.constant 0 : index
    %12 = vector.load %arg4[%c0_9, %c0_10] : memref<1x32xf32, #tpu.memory_space<vmem>>, vector<1x32xf32>
    %13 = vector.broadcast %12 : vector<1x32xf32> to vector<16x32xf32>
    %14 = arith.addf %11, %13 : vector<16x32xf32>
    %c0_11 = arith.constant 0 : index
    %c0_12 = arith.constant 0 : index
    %15 = vector.load %arg5[%c0_11, %c0_12] : memref<16x32xf32, #tpu.memory_space<vmem>>, vector<16x32xf32>
    tpu.vector_store %arg5[%c0_11, %c0_12], %14 {strides = array<i32>} : memref<16x32xf32, #tpu.memory_space<vmem>>, vector<16x32xf32>,
    return
  }
}

</mosaic_0001>

<llo_original>
// kernel: tpu_custom_call.1
$region0: #{tpu_custom_call.1}
  #allocation0 [shape = 'u32[]', space=smem, size = 0x4, offset = 0x4, fixed_abs, tag = 'smem constant byte address 0x4 - core index']
  #allocation1 [shape = 'u32[144,128]{1,0:T(1,128)}', space=vmem, size = 0x12000, scoped, tag = 'internal scratch']
  %s0 = inlined_call_operand.vmem [shape: f32[16,32], index: 0, kind: input, shape index: {}]
  %s1 = inlined_call_operand.vmem [shape: bf16[32,64], index: 1, kind: input, shape index: {}]
  %s2 = inlined_call_operand.vmem [shape: bf16[64,32], index: 2, kind: input, shape index: {}]
  %s3 = inlined_call_operand.vmem [shape: f32[1,64], index: 3, kind: input, shape index: {}]
  %s4 = inlined_call_operand.vmem [shape: f32[1,32], index: 4, kind: input, shape index: {}]
  %s5 = inlined_call_operand.hbm [shape: f32[16,32], index: 5, kind: output, shape index: {}]
  %s6 = sld [smem:[#allocation0]]
  $region30: #{tpu_custom_call.1} parent=0
    _
  %s8 = ssub.s32 1, %s6
  %s9 = scalar_select 0, %s8, %s6
  $region1: #{tpu_custom_call.1} parent=0
    #allocation2 [shape = 'u8[8192]{0}', space=vmem, size = 0x2000, scoped, tag = 'output window, operand 0, single buffered']
    #allocation3 [shape = 's32[1]{0}', space=sflag, size = 0x4, scoped, tag = 'scoped memory for tpu_custom_call.1']
    %10 = vsyncpa [#allocation3], 0
    // Predicated region
    $region2: #{tpu_custom_call.1} parent=1 // pred_check
      _
    $region3: #{tpu_custom_call.1} parent=1 // pred_check_branch
      %12 = sbr.rel (0) target = $region5
    $region4: #{tpu_custom_call.1} parent=1 // pred_region
      _
    $region5: #{tpu_custom_call.1} parent=1 // pred_fallthru
      _
    // Predicated region
    $region6: #{tpu_custom_call.1} parent=1 // pred_check
      _
    $region7: #{tpu_custom_call.1} parent=1 // pred_check_branch
      %14 = sbr.rel (0) target = $region9
    $region8: #{tpu_custom_call.1} parent=1 // pred_region
      _
    $region9: #{tpu_custom_call.1} parent=1 // pred_fallthru
      _
    // Predicated region
    $region10: #{tpu_custom_call.1} parent=1 // pred_check
      _
    $region11: #{tpu_custom_call.1} parent=1 // pred_check_branch
      %16 = sbr.rel (0) target = $region13
    $region12: #{tpu_custom_call.1} parent=1 // pred_region
      _
    $region13: #{tpu_custom_call.1} parent=1 // pred_fallthru
      _
    // Predicated region
    $region14: #{tpu_custom_call.1} parent=1 // pred_check
      _
    $region15: #{tpu_custom_call.1} parent=1 // pred_check_branch
      %18 = sbr.rel (0) target = $region17
    $region16: #{tpu_custom_call.1} parent=1 // pred_region
      _
    $region17: #{tpu_custom_call.1} parent=1 // pred_fallthru
      _
    // Predicated region
    $region18: #{tpu_custom_call.1} parent=1 // pred_check
      _
    $region19: #{tpu_custom_call.1} parent=1 // pred_check_branch
      %20 = sbr.rel (0) target = $region21
    $region20: #{tpu_custom_call.1} parent=1 // pred_region
      _
    $region21: #{tpu_custom_call.1} parent=1 // pred_fallthru
      _
    %v22 = vld [vmem:[%s0] sm:$0xff]
    %v23 = vld [vmem:[%s0 + $0x8] sm:$0xff]
    %v24 = vpack.c.bf16 %v23, %v22
    %v25 = vld [vmem:[%s1] sm:$0xf]
    %v26 = vld [vmem:[%s1 + $0x4] sm:$0xf]
    %v27 = vld [vmem:[%s1 + $0x8] sm:$0xf]
    %v28 = vld [vmem:[%s1 + $0xc] sm:$0xf]
    %v29 = vld [vmem:[%s3] sm:$0x1]
    %v31 = vlaneseq
    %v32 = vshrl.u32 %v31, 7
    %v33 = vsub.s32 0, %v32
    %v34 = vrot.slane %v29, %v33
    %v40 = vunpack.c.l.b16 %v25
    %v41 = vunpack.c.l.b16 %v26
    %v42 = vunpack.c.l.b16 %v27
    %v43 = vunpack.c.l.b16 %v28
    %v44 = vpack.c.b16 %v41, %v40
    %v45 = vpack.c.b16 %v43, %v42
    %vm48 = vcmask 261120
    %v50 = vsel %vm48, %v24, 0
    %52 = vmatprep.subr.bf16.mxu0 0
    %53 = vmatpush1.bf16.msra.mxu0 %v44
    %54 = vmatprep.subr.bf16.mxu0 0
    %55 = vmatpush1.bf16.msra.mxu0 %v45
    %56 = vmatprep.subr.bf16.mxu0 0
    %57 = vmatpush1.bf16.msra.mxu0 0
    %58 = vmatprep.subr.bf16.mxu0 0
    %59 = vmatpush1.bf16.msra.mxu0 0
    %60 = vmatprep.subr.bf16.mxu0 0
    %61 = vmatpush1.bf16.msra.mxu0 0
    %62 = vmatprep.subr.bf16.mxu0 0
    %63 = vmatpush1.bf16.msra.mxu0 0
    %64 = vmatprep.subr.bf16.mxu0 0
    %65 = vmatpush1.bf16.msra.mxu0 0
    %66 = vmatprep.subr.bf16.mxu0 0
    %67 = vmatpush1.bf16.msra.mxu0 0
    %68 = vmatprep.subr.bf16.mxu0 0
    %69 = vmatpush1.bf16.msra.mxu0 0
    %70 = vmatprep.subr.bf16.mxu0 0
    %71 = vmatpush1.bf16.msra.mxu0 0
    %72 = vmatprep.subr.bf16.mxu0 0
    %73 = vmatpush1.bf16.msra.mxu0 0
    %74 = vmatprep.subr.bf16.mxu0 0
    %75 = vmatpush1.bf16.msra.mxu0 0
    %76 = vmatprep.subr.bf16.mxu0 0
    %77 = vmatpush1.bf16.msra.mxu0 0
    %78 = vmatprep.subr.bf16.mxu0 0
    %79 = vmatpush1.bf16.msra.mxu0 0
    %80 = vmatprep.subr.bf16.mxu0 0
    %81 = vmatpush1.bf16.msra.mxu0 0
    %82 = vmatprep.subr.bf16.mxu0 0
    %83 = vmatpush1.bf16.msra.mxu0 0
    %84 = vmatprep.mubr.bf16.mxu0 0
    %85 = vmatmul.mubr.bf16.gmra.mrb[0].mxu0 %v50
    %v86 = vpop.f32.mrb[0].mxu0
    %v87 = vadd.f32 %v34, %v86
    %v88 = vpop.f32.mrb[0].mxu0
    %v89 = vpop.f32.mrb[0].mxu0
    %v90 = vadd.f32 %v34, %v89
    %v91 = vpop.f32.mrb[0].mxu0
    %92 = vdwg.mxu0
    %v93 = vmax.f32 %v87, 0.0
    %v94 = vmax.f32 %v90, 0.0
    %v95 = vpack.c.bf16 %v94, %v93
    %v96 = vld [vmem:[%s2] sm:$0xf]
    %v97 = vld [vmem:[%s2 + $0x4] sm:$0xf]
    %v98 = vld [vmem:[%s2 + $0x8] sm:$0xf]
    %v99 = vld [vmem:[%s2 + $0xc] sm:$0xf]
    %v100 = vld [vmem:[%s2 + $0x10] sm:$0xf]
    %v101 = vld [vmem:[%s2 + $0x14] sm:$0xf]
    %v102 = vld [vmem:[%s2 + $0x18] sm:$0xf]
    %v103 = vld [vmem:[%s2 + $0x1c] sm:$0xf]
    %v104 = vld [vmem:[%s4] sm:$0x1]
    %v106 = vlaneseq
    %v107 = vshrl.u32 %v106, 7
    %v108 = vsub.s32 0, %v107
    %v109 = vrot.slane %v104, %v108
    %v119 = vunpack.c.l.b16 %v96
    %v120 = vunpack.c.l.b16 %v97
    %v121 = vunpack.c.l.b16 %v98
    %v122 = vunpack.c.l.b16 %v99
    %v123 = vunpack.c.l.b16 %v100
    %v124 = vunpack.c.l.b16 %v101
    %v125 = vunpack.c.l.b16 %v102
    %v126 = vunpack.c.l.b16 %v103
    %v127 = vpack.c.b16 %v120, %v119
    %v128 = vpack.c.b16 %v122, %v121
    %v129 = vpack.c.b16 %v124, %v123
    %v130 = vpack.c.b16 %v126, %v125
    %vm135 = vcmask 523264
    %v137 = vsel %vm135, %v95, 0
    %139 = vmatprep.subr.bf16.mxu0 0
    %140 = vmatpush1.bf16.msra.mxu0 %v127
    %141 = vmatprep.subr.bf16.mxu0 0
    %142 = vmatpush1.bf16.msra.mxu0 %v128
    %143 = vmatprep.subr.bf16.mxu0 0
    %144 = vmatpush1.bf16.msra.mxu0 %v129
    %145 = vmatprep.subr.bf16.mxu0 0
    %146 = vmatpush1.bf16.msra.mxu0 %v130
    %147 = vmatprep.subr.bf16.mxu0 0
    %148 = vmatpush1.bf16.msra.mxu0 0
    %149 = vmatprep.subr.bf16.mxu0 0
    %150 = vmatpush1.bf16.msra.mxu0 0
    %151 = vmatprep.subr.bf16.mxu0 0
    %152 = vmatpush1.bf16.msra.mxu0 0
    %153 = vmatprep.subr.bf16.mxu0 0
    %154 = vmatpush1.bf16.msra.mxu0 0
    %155 = vmatprep.subr.bf16.mxu0 0
    %156 = vmatpush1.bf16.msra.mxu0 0
    %157 = vmatprep.subr.bf16.mxu0 0
    %158 = vmatpush1.bf16.msra.mxu0 0
    %159 = vmatprep.subr.bf16.mxu0 0
    %160 = vmatpush1.bf16.msra.mxu0 0
    %161 = vmatprep.subr.bf16.mxu0 0
    %162 = vmatpush1.bf16.msra.mxu0 0
    %163 = vmatprep.subr.bf16.mxu0 0
    %164 = vmatpush1.bf16.msra.mxu0 0
    %165 = vmatprep.subr.bf16.mxu0 0
    %166 = vmatpush1.bf16.msra.mxu0 0
    %167 = vmatprep.subr.bf16.mxu0 0
    %168 = vmatpush1.bf16.msra.mxu0 0
    %169 = vmatprep.subr.bf16.mxu0 0
    %170 = vmatpush1.bf16.msra.mxu0 0
    %171 = vmatprep.mubr.bf16.mxu0 0
    %172 = vmatmul.mubr.bf16.gmra.mrb[0].mxu0 %v137
    %v173 = vpop.f32.mrb[0].mxu0
    %v174 = vadd.f32 %v109, %v173
    %v175 = vpop.f32.mrb[0].mxu0
    %v176 = vpop.f32.mrb[0].mxu0
    %v177 = vadd.f32 %v109, %v176
    %v178 = vpop.f32.mrb[0].mxu0
    %179 = vdwg.mxu0
    %180 = vst.msk [vmem:[#allocation2] sm:$0xff] %vm48, %v174
    %181 = vst.msk [vmem:[#allocation2 + $0x8] sm:$0xff] %vm48, %v177
    // Predicated region
    $region22: #{tpu_custom_call.1} parent=1 // pred_check
      _
    $region23: #{tpu_custom_call.1} parent=1 // pred_check_branch
      %183 = sbr.rel (0) target = $region25
    $region24: #{tpu_custom_call.1} parent=1 // pred_region
      %s185 = ssub.s32 256, 256
      %186 = vsyncadd [#allocation3], %s185
      %s187 = sshll.u32 [#allocation2], 4
      %s188 = int_to_ptr.vmem [resolvable:$true] %s187
      %193 = dma.vmem_to_hbm [thread:$0]  %s188, 256, %s5, [#allocation3], 128, 128, 8
    $region25: #{tpu_custom_call.1} parent=1 // pred_fallthru
      _
    // Predicated region
    $region26: #{tpu_custom_call.1} parent=1 // pred_check
      _
    $region27: #{tpu_custom_call.1} parent=1 // pred_check_branch
      %195 = sbr.rel (0) target = $region29
    $region28: #{tpu_custom_call.1} parent=1 // pred_region
      %196 = dma.done [#allocation3], 256
    $region29: #{tpu_custom_call.1} parent=1 // pred_fallthru
      _
    %197 = vsyncpa [#allocation3], 1

</llo_original>
